<compile_context>
chip_gen: v7x
topology: tpu7x:2x2x1
jax: 0.10.0
libtpu: 0.0.40
codegen_flags: <defaults>
</compile_context>

<pallas_src>
import jax
import jax.numpy as jnp
from jax.experimental import pallas as pl
from jax.experimental.pallas import tpu as pltpu

ATTN_SIZE = 64
_NEG_BIG = -1e30   # finite "minus infinity" for masking


def _round_up(x, m):
    return ((x + m - 1) // m) * m


def bau_attn_kernel(enc_ref, hid_ref, lens_ref, w_enc_ref, w_hid_ref,
                    b_attn_ref, v_ref, out_ref,
                    bias_sc, m_sc, l_sc, acc_sc):
    li = pl.program_id(1)
    B_tile, L_tile, D_pad = enc_ref.shape
    A_pad = w_enc_ref.shape[1]

    @pl.when(li == 0)
    def _init():
        # hidden projection with b_attn folded in, computed once per batch tile.
        bias_sc[...] = (
            jnp.dot(hid_ref[...], w_hid_ref[...],
                    preferred_element_type=jnp.float32)
            + b_attn_ref[...])
        m_sc[...] = jnp.full(m_sc.shape, _NEG_BIG, jnp.float32)
        l_sc[...] = jnp.zeros(l_sc.shape, jnp.float32)
        acc_sc[...] = jnp.zeros(acc_sc.shape, jnp.float32)

    enc = enc_ref[...]                                          # (Bt, Lt, Dp)

    # parts = enc @ W_enc on the MXU.  Reshape is tile-aligned
    # (L_tile % 8 == 0, D_pad % 128 == 0) -> free relabeling, no relayout copy.
    parts = jnp.dot(enc.reshape(B_tile * L_tile, D_pad), w_enc_ref[...],
                    preferred_element_type=jnp.float32)
    parts = parts.reshape(B_tile, L_tile, A_pad)

    t = jnp.tanh(parts + bias_sc[...][:, None, :]) * v_ref[...][None, :, :]
    scores = jnp.sum(t, axis=-1)                                # (Bt, Lt)

    # Mask: positions >= lens[b] get a large negative score.  (The reference's
    # +1.0 on valid positions is a constant column offset that cancels in the
    # softmax, so it is dropped.)
    lpos = li * L_tile + jax.lax.broadcasted_iota(jnp.int32, (B_tile, L_tile), 1)
    s = jnp.where(lpos < lens_ref[...], scores, _NEG_BIG)

    # --- online softmax over L chunks ---
    m_new = jnp.maximum(m_sc[...], jnp.max(s, axis=-1, keepdims=True))  # (Bt,1)
    alpha = jnp.exp(m_sc[...] - m_new)
    p = jnp.exp(s - m_new)                                      # masked -> 0
    l_sc[...] = alpha * l_sc[...] + jnp.sum(p, axis=-1, keepdims=True)
    # TODO(synk): for large batch tiles this epilogue could also go on the MXU.
    acc_sc[...] = alpha * acc_sc[...] + jnp.sum(p[:, :, None] * enc, axis=1)
    m_sc[...] = m_new

    @pl.when(li == pl.num_programs(1) - 1)
    def _finalize():
        # exact division (approx reciprocal would cost ~1e-4 relative error)
        out_ref[...] = acc_sc[...] / l_sc[...]


def bau_attn(enc_outputs, lens, hidden_states, W_enc, b_attn, W_hidden, v,
             *, l_tile=512):
    L, B, D = enc_outputs.shape
    H = hidden_states.shape[1]
    A = W_enc.shape[1]
    f32 = jnp.float32

    # Lane/sublane-dense padded sizes (wrapper-side layout plumbing).
    D_pad = _round_up(D, 128)
    A_pad = _round_up(A, 128)
    B_tile = 8
    B_pad = _round_up(B, B_tile)
    L_tile = min(_round_up(L, 8), _round_up(l_tile, 8))
    L_pad = _round_up(L, L_tile)

    enc = jnp.transpose(enc_outputs.astype(f32), (1, 0, 2))      # (B, L, D)
    enc = jnp.pad(enc, ((0, B_pad - B), (0, L_pad - L), (0, D_pad - D)))
    hid = jnp.pad(hidden_states.astype(f32), ((0, B_pad - B), (0, 0)))
    lens_arr = jnp.asarray(lens, jnp.int32).reshape(B)
    lens_p = jnp.pad(lens_arr, (0, B_pad - B), constant_values=1).reshape(B_pad, 1)
    w_enc = jnp.pad(W_enc.astype(f32), ((0, D_pad - D), (0, A_pad - A)))
    w_hid = jnp.pad(W_hidden.astype(f32), ((0, 0), (0, A_pad - A)))
    b_a = jnp.pad(b_attn.astype(f32).reshape(1, A), ((0, 0), (0, A_pad - A)))
    v_p = jnp.pad(v.astype(f32).reshape(1, A), ((0, 0), (0, A_pad - A)))

    grid = (B_pad // B_tile, L_pad // L_tile)

    cost = pl.CostEstimate(
        flops=int(2 * B * L * D * A + 2 * B * H * A + 2 * B * L * D
                  + 5 * B * L * A),
        transcendentals=int(B * L * A + B * L),
        bytes_accessed=int(4 * (L * B * D + B * H + D * A + H * A
                                + 2 * A + B + B * D)),
    )

    out = pl.pallas_call(
        bau_attn_kernel,
        out_shape=jax.ShapeDtypeStruct((B_pad, D_pad), f32),
        grid_spec=pltpu.PrefetchScalarGridSpec(
            num_scalar_prefetch=0,
            grid=grid,
            in_specs=[
                pl.BlockSpec((B_tile, L_tile, D_pad), lambda bi, li: (bi, li, 0)),
                pl.BlockSpec((B_tile, H), lambda bi, li: (bi, 0)),
                pl.BlockSpec((B_tile, 1), lambda bi, li: (bi, 0)),
                pl.BlockSpec((D_pad, A_pad), lambda bi, li: (0, 0)),
                pl.BlockSpec((H, A_pad), lambda bi, li: (0, 0)),
                pl.BlockSpec((1, A_pad), lambda bi, li: (0, 0)),
                pl.BlockSpec((1, A_pad), lambda bi, li: (0, 0)),
            ],
            out_specs=pl.BlockSpec((B_tile, D_pad), lambda bi, li: (bi, 0)),
            scratch_shapes=[
                pltpu.VMEM((B_tile, A_pad), f32),   # bias = hid @ W_hidden + b_attn
                pltpu.VMEM((B_tile, 1), f32),       # running max
                pltpu.VMEM((B_tile, 1), f32),       # running denominator
                pltpu.VMEM((B_tile, D_pad), f32),   # output accumulator
            ],
        ),
        compiler_params=pltpu.CompilerParams(
            dimension_semantics=("parallel", "arbitrary"),
            vmem_limit_bytes=32 * 1024 * 1024,
        ),
        cost_estimate=cost,
    )(enc, hid, lens_p, w_enc, w_hid, b_a, v_p)

    return out[:B, :D]


def bau_attn_ref(enc_outputs, lens, hidden_states, W_enc, b_attn, W_hidden, v):
    """Pure-JAX reference mirroring the PyTorch forward exactly."""
    parts = jnp.einsum('lbd,da->lba', enc_outputs, W_enc) + b_attn
    scores = jnp.sum(jnp.tanh(parts + hidden_states @ W_hidden) * v, axis=2)
    L, B = scores.shape
    lpos = jnp.arange(L)[:, None]
    mask = jnp.where(lpos < jnp.asarray(lens)[None, :], 1.0, -jnp.inf)
    p = jax.nn.softmax(mask + scores, axis=0)
    return jnp.sum(p[:, :, None] * enc_outputs, axis=0)


if __name__ == "__main__":
    # Small shapes consistent with the module's forward signature.
    L, B = 8, 2            # seq len, batch
    enc_size = 32          # d
    hidden_size = 32       # hidden
    A = ATTN_SIZE

    key = jax.random.PRNGKey(0)
    k1, k2, k3, k4, k5 = jax.random.split(key, 5)

    # Deterministic parameter init (xavier_normal_ for W_enc/W_hidden, zeros
    # b_attn, standard-normal v — matching __init__ + reset_params).
    W_enc = jax.random.normal(k1, (enc_size, A), dtype=jnp.float32) * \
        (2.0 / (enc_size + A)) ** 0.5
    W_hidden = jax.random.normal(k2, (hidden_size, A), dtype=jnp.float32) * \
        (2.0 / (hidden_size + A)) ** 0.5
    b_attn = jnp.zeros((A,), dtype=jnp.float32)
    v = jax.random.normal(k3, (A,), dtype=jnp.float32)

    enc_outputs = jax.random.normal(k4, (L, B, enc_size), dtype=jnp.float32)
    hidden_states = jax.random.normal(k5, (B, hidden_size), dtype=jnp.float32)
    lens = [8, 5]          # max(lens) == L, as the PyTorch code requires

    out = bau_attn(enc_outputs, lens, hidden_states, W_enc, b_attn, W_hidden, v)
    out = jax.block_until_ready(out)

    ref = bau_attn_ref(enc_outputs, lens, hidden_states, W_enc, b_attn, W_hidden, v)
    assert out.shape == (B, enc_size)
    assert jnp.allclose(out, ref, atol=1e-5, rtol=1e-5), "mismatch vs JAX reference"

    print("KERNEL_OK")
</pallas_src>

<mosaic_0001>
module attributes {stable_mosaic.version = 11 : i64} {
  func.func @bau_attn_kernel(%arg0: i32, %arg1: i32, %arg2: memref<8x8x128xf32, #tpu.memory_space<vmem>>, %arg3: memref<8x32xf32, #tpu.memory_space<vmem>>, %arg4: memref<8x1xi32, #tpu.memory_space<vmem>>, %arg5: memref<128x128xf32, #tpu.memory_space<vmem>>, %arg6: memref<32x128xf32, #tpu.memory_space<vmem>>, %arg7: memref<1x128xf32, #tpu.memory_space<vmem>>, %arg8: memref<1x128xf32, #tpu.memory_space<vmem>>, %arg9: memref<8x128xf32, #tpu.memory_space<vmem>>, %arg10: memref<8x128xf32, #tpu.memory_space<vmem>>, %arg11: memref<8x1xf32, #tpu.memory_space<vmem>>, %arg12: memref<8x1xf32, #tpu.memory_space<vmem>>, %arg13: memref<8x128xf32, #tpu.memory_space<vmem>>) attributes {dimension_semantics = [#tpu.dimension_semantics<parallel>, #tpu.dimension_semantics<arbitrary>], iteration_bounds = array<i64: 1, 1>, scalar_prefetch = 0 : i64, scratch_operands = 4 : i64, tpu.core_type = #tpu.core_type<tc>, window_params = [{transform_indices = @transform_0, window_bounds = array<i64: 8, 8, 128>}, {transform_indices = @transform_1, window_bounds = array<i64: 8, 32>}, {transform_indices = @transform_2, window_bounds = array<i64: 8, 1>}, {pipeline_mode = #tpu.pipeline_mode<synchronous>, transform_indices = @transform_3, window_bounds = array<i64: 128, 128>}, {pipeline_mode = #tpu.pipeline_mode<synchronous>, transform_indices = @transform_4, window_bounds = array<i64: 32, 128>}, {pipeline_mode = #tpu.pipeline_mode<synchronous>, transform_indices = @transform_5, window_bounds = array<i64: 1, 128>}, {pipeline_mode = #tpu.pipeline_mode<synchronous>, transform_indices = @transform_6, window_bounds = array<i64: 1, 128>}, {transform_indices = @transform_7, window_bounds = array<i64: 8, 128>}]} {
    %c0_i32 = arith.constant 0 : i32
    %0 = arith.cmpi eq, %arg1, %c0_i32 : i32
    %1 = arith.extui %0 : i1 to i32
    %c0_i32_0 = arith.constant 0 : i32
    %2 = arith.cmpi ne, %1, %c0_i32_0 : i32
    scf.if %2 {
      %c0_32 = arith.constant 0 : index
      %c0_33 = arith.constant 0 : index
      %56 = vector.load %arg3[%c0_32, %c0_33] : memref<8x32xf32, #tpu.memory_space<vmem>>, vector<8x32xf32>
      %c0_34 = arith.constant 0 : index
      %c0_35 = arith.constant 0 : index
      %57 = vector.load %arg6[%c0_34, %c0_35] : memref<32x128xf32, #tpu.memory_space<vmem>>, vector<32x128xf32>
      %cst_36 = arith.constant dense<0.000000e+00> : vector<8x128xf32>
      %58 = tpu.matmul %56, %57, %cst_36 {dimension_numbers = #tpu.dot_dimension_numbers<[1], [0], [0], [1], [0, 0, 1, 1], [], []>} : vector<8x32xf32>, vector<32x128xf32>, vector<8x128xf32> -> vector<8x128xf32>
      %c0_37 = arith.constant 0 : index
      %c0_38 = arith.constant 0 : index
      %59 = vector.load %arg7[%c0_37, %c0_38] : memref<1x128xf32, #tpu.memory_space<vmem>>, vector<1x128xf32>
      %60 = vector.broadcast %59 : vector<1x128xf32> to vector<8x128xf32>
      %61 = arith.addf %58, %60 : vector<8x128xf32>
      %c0_39 = arith.constant 0 : index
      %c0_40 = arith.constant 0 : index
      %62 = vector.load %arg10[%c0_39, %c0_40] : memref<8x128xf32, #tpu.memory_space<vmem>>, vector<8x128xf32>
      tpu.vector_store %arg10[%c0_39, %c0_40], %61 {strides = array<i32>} : memref<8x128xf32, #tpu.memory_space<vmem>>, vector<8x128xf32>,
      %cst_41 = arith.constant -1.000000e+30 : f32
      %63 = vector.broadcast %cst_41 : f32 to vector<8x1xf32>
      %c0_42 = arith.constant 0 : index
      %c0_43 = arith.constant 0 : index
      %64 = vector.load %arg11[%c0_42, %c0_43] : memref<8x1xf32, #tpu.memory_space<vmem>>, vector<8x1xf32>
      tpu.vector_store %arg11[%c0_42, %c0_43], %63 {strides = array<i32>} : memref<8x1xf32, #tpu.memory_space<vmem>>, vector<8x1xf32>,
      %cst_44 = arith.constant 0.000000e+00 : f32
      %65 = vector.broadcast %cst_44 : f32 to vector<8x1xf32>
      %c0_45 = arith.constant 0 : index
      %c0_46 = arith.constant 0 : index
      %66 = vector.load %arg12[%c0_45, %c0_46] : memref<8x1xf32, #tpu.memory_space<vmem>>, vector<8x1xf32>
      tpu.vector_store %arg12[%c0_45, %c0_46], %65 {strides = array<i32>} : memref<8x1xf32, #tpu.memory_space<vmem>>, vector<8x1xf32>,
      %cst_47 = arith.constant 0.000000e+00 : f32
      %67 = vector.broadcast %cst_47 : f32 to vector<8x128xf32>
      %c0_48 = arith.constant 0 : index
      %c0_49 = arith.constant 0 : index
      %68 = vector.load %arg13[%c0_48, %c0_49] : memref<8x128xf32, #tpu.memory_space<vmem>>, vector<8x128xf32>
      tpu.vector_store %arg13[%c0_48, %c0_49], %67 {strides = array<i32>} : memref<8x128xf32, #tpu.memory_space<vmem>>, vector<8x128xf32>,
    } else {
    }
    %c0 = arith.constant 0 : index
    %c0_1 = arith.constant 0 : index
    %c0_2 = arith.constant 0 : index
    %3 = vector.load %arg2[%c0, %c0_1, %c0_2] : memref<8x8x128xf32, #tpu.memory_space<vmem>>, vector<8x8x128xf32>
    %4 = vector.shape_cast %3 : vector<8x8x128xf32> to vector<64x128xf32>
    %c0_3 = arith.constant 0 : index
    %c0_4 = arith.constant 0 : index
    %5 = vector.load %arg5[%c0_3, %c0_4] : memref<128x128xf32, #tpu.memory_space<vmem>>, vector<128x128xf32>
    %cst = arith.constant dense<0.000000e+00> : vector<64x128xf32>
    %6 = tpu.matmul %4, %5, %cst {dimension_numbers = #tpu.dot_dimension_numbers<[1], [0], [0], [1], [0, 0, 1, 1], [], []>} : vector<64x128xf32>, vector<128x128xf32>, vector<64x128xf32> -> vector<64x128xf32>
    %7 = vector.shape_cast %6 : vector<64x128xf32> to vector<8x8x128xf32>
    %c0_5 = arith.constant 0 : index
    %c0_6 = arith.constant 0 : index
    %8 = vector.load %arg10[%c0_5, %c0_6] : memref<8x128xf32, #tpu.memory_space<vmem>>, vector<8x128xf32>
    %9 = vector.shape_cast %8 : vector<8x128xf32> to vector<8x1x128xf32>
    %10 = vector.broadcast %9 : vector<8x1x128xf32> to vector<8x8x128xf32>
    %11 = arith.addf %7, %10 : vector<8x8x128xf32>
    %12 = math.tanh %11 : vector<8x8x128xf32>
    %c0_7 = arith.constant 0 : index
    %c0_8 = arith.constant 0 : index
    %13 = vector.load %arg8[%c0_7, %c0_8] : memref<1x128xf32, #tpu.memory_space<vmem>>, vector<1x128xf32>
    %14 = vector.shape_cast %13 : vector<1x128xf32> to vector<1x1x128xf32>
    %15 = vector.broadcast %14 : vector<1x1x128xf32> to vector<8x8x128xf32>
    %16 = arith.mulf %12, %15 : vector<8x8x128xf32>
    %cst_9 = arith.constant dense<0.000000e+00> : vector<8x8xf32>
    %17 = vector.multi_reduction <add>, %16, %cst_9 [2] : vector<8x8x128xf32> to vector<8x8xf32>
    %c8_i32 = arith.constant 8 : i32
    %18 = arith.muli %arg1, %c8_i32 : i32
    %19 = tpu.iota {dimensions = array<i32: 1>} : vector<8x8xi32>
    %20 = vector.broadcast %18 : i32 to vector<8x8xi32>
    %21 = arith.addi %20, %19 : vector<8x8xi32>
    %c0_10 = arith.constant 0 : index
    %c0_11 = arith.constant 0 : index
    %22 = vector.load %arg4[%c0_10, %c0_11] : memref<8x1xi32, #tpu.memory_space<vmem>>, vector<8x1xi32>
    %23 = vector.broadcast %22 : vector<8x1xi32> to vector<8x8xi32>
    %24 = arith.cmpi slt, %21, %23 : vector<8x8xi32>
    %cst_12 = arith.constant -1.000000e+30 : f32
    %25 = vector.broadcast %cst_12 : f32 to vector<8x8xf32>
    %26 = arith.select %24, %17, %25 : vector<8x8xi1>, vector<8x8xf32>
    %c0_13 = arith.constant 0 : index
    %c0_14 = arith.constant 0 : index
    %27 = vector.load %arg11[%c0_13, %c0_14] : memref<8x1xf32, #tpu.memory_space<vmem>>, vector<8x1xf32>
    %cst_15 = arith.constant dense<0xFF800000> : vector<8xf32>
    %28 = vector.multi_reduction <maximumf>, %26, %cst_15 [1] : vector<8x8xf32> to vector<8xf32>
    %29 = vector.shape_cast %28 : vector<8xf32> to vector<8x1xf32>
    %30 = arith.maximumf %27, %29 : vector<8x1xf32>
    %c0_16 = arith.constant 0 : index
    %c0_17 = arith.constant 0 : index
    %31 = vector.load %arg11[%c0_16, %c0_17] : memref<8x1xf32, #tpu.memory_space<vmem>>, vector<8x1xf32>
    %32 = arith.subf %31, %30 : vector<8x1xf32>
    %33 = math.exp %32 : vector<8x1xf32>
    %34 = vector.broadcast %30 : vector<8x1xf32> to vector<8x8xf32>
    %35 = arith.subf %26, %34 : vector<8x8xf32>
    %36 = math.exp %35 : vector<8x8xf32>
    %c0_18 = arith.constant 0 : index
    %c0_19 = arith.constant 0 : index
    %37 = vector.load %arg12[%c0_18, %c0_19] : memref<8x1xf32, #tpu.memory_space<vmem>>, vector<8x1xf32>
    %38 = arith.mulf %33, %37 : vector<8x1xf32>
    %cst_20 = arith.constant dense<0.000000e+00> : vector<8xf32>
    %39 = vector.multi_reduction <add>, %36, %cst_20 [1] : vector<8x8xf32> to vector<8xf32>
    %40 = vector.shape_cast %39 : vector<8xf32> to vector<8x1xf32>
    %41 = arith.addf %38, %40 : vector<8x1xf32>
    %c0_21 = arith.constant 0 : index
    %c0_22 = arith.constant 0 : index
    %42 = vector.load %arg12[%c0_21, %c0_22] : memref<8x1xf32, #tpu.memory_space<vmem>>, vector<8x1xf32>
    tpu.vector_store %arg12[%c0_21, %c0_22], %41 {strides = array<i32>} : memref<8x1xf32, #tpu.memory_space<vmem>>, vector<8x1xf32>,
    %c0_23 = arith.constant 0 : index
    %c0_24 = arith.constant 0 : index
    %43 = vector.load %arg13[%c0_23, %c0_24] : memref<8x128xf32, #tpu.memory_space<vmem>>, vector<8x128xf32>
    %44 = vector.broadcast %33 : vector<8x1xf32> to vector<8x128xf32>
    %45 = arith.mulf %44, %43 : vector<8x128xf32>
    %46 = vector.shape_cast %36 : vector<8x8xf32> to vector<8x8x1xf32>
    %47 = vector.broadcast %46 : vector<8x8x1xf32> to vector<8x8x128xf32>
    %48 = arith.mulf %47, %3 : vector<8x8x128xf32>
    %cst_25 = arith.constant dense<0.000000e+00> : vector<8x128xf32>
    %49 = vector.multi_reduction <add>, %48, %cst_25 [1] : vector<8x8x128xf32> to vector<8x128xf32>
    %50 = arith.addf %45, %49 : vector<8x128xf32>
    %c0_26 = arith.constant 0 : index
    %c0_27 = arith.constant 0 : index
    %51 = vector.load %arg13[%c0_26, %c0_27] : memref<8x128xf32, #tpu.memory_space<vmem>>, vector<8x128xf32>
    tpu.vector_store %arg13[%c0_26, %c0_27], %50 {strides = array<i32>} : memref<8x128xf32, #tpu.memory_space<vmem>>, vector<8x128xf32>,
    %c0_28 = arith.constant 0 : index
    %c0_29 = arith.constant 0 : index
    %52 = vector.load %arg11[%c0_28, %c0_29] : memref<8x1xf32, #tpu.memory_space<vmem>>, vector<8x1xf32>
    tpu.vector_store %arg11[%c0_28, %c0_29], %30 {strides = array<i32>} : memref<8x1xf32, #tpu.memory_space<vmem>>, vector<8x1xf32>,
    %c0_i32_30 = arith.constant 0 : i32
    %53 = arith.cmpi eq, %arg1, %c0_i32_30 : i32
    %54 = arith.extui %53 : i1 to i32
    %c0_i32_31 = arith.constant 0 : i32
    %55 = arith.cmpi ne, %54, %c0_i32_31 : i32
    scf.if %55 {
      %c0_32 = arith.constant 0 : index
      %c0_33 = arith.constant 0 : index
      %56 = vector.load %arg13[%c0_32, %c0_33] : memref<8x128xf32, #tpu.memory_space<vmem>>, vector<8x128xf32>
      %c0_34 = arith.constant 0 : index
      %c0_35 = arith.constant 0 : index
      %57 = vector.load %arg12[%c0_34, %c0_35] : memref<8x1xf32, #tpu.memory_space<vmem>>, vector<8x1xf32>
      %58 = vector.broadcast %57 : vector<8x1xf32> to vector<8x128xf32>
      %59 = arith.divf %56, %58 : vector<8x128xf32>
      %c0_36 = arith.constant 0 : index
      %c0_37 = arith.constant 0 : index
      %60 = vector.load %arg9[%c0_36, %c0_37] : memref<8x128xf32, #tpu.memory_space<vmem>>, vector<8x128xf32>
      tpu.vector_store %arg9[%c0_36, %c0_37], %59 {strides = array<i32>} : memref<8x128xf32, #tpu.memory_space<vmem>>, vector<8x128xf32>,
    } else {
    }
    return
  }
  func.func @transform_0(%arg0: i32, %arg1: i32) -> (i32, i32, i32) {
    %c0_i32 = arith.constant 0 : i32
    %c0_i32_0 = arith.constant 0 : i32
    return %arg0, %arg1, %c0_i32 : i32, i32, i32
  }
  func.func @transform_1(%arg0: i32, %arg1: i32) -> (i32, i32) {
    %c0_i32 = arith.constant 0 : i32
    %c0_i32_0 = arith.constant 0 : i32
    return %arg0, %c0_i32 : i32, i32
  }
  func.func @transform_2(%arg0: i32, %arg1: i32) -> (i32, i32) {
    %c0_i32 = arith.constant 0 : i32
    %c0_i32_0 = arith.constant 0 : i32
    return %arg0, %c0_i32 : i32, i32
  }
  func.func @transform_3(%arg0: i32, %arg1: i32) -> (i32, i32) {
    %c0_i32 = arith.constant 0 : i32
    %c0_i32_0 = arith.constant 0 : i32
    %c0_i32_1 = arith.constant 0 : i32
    return %c0_i32, %c0_i32_0 : i32, i32
  }
  func.func @transform_4(%arg0: i32, %arg1: i32) -> (i32, i32) {
    %c0_i32 = arith.constant 0 : i32
    %c0_i32_0 = arith.constant 0 : i32
    %c0_i32_1 = arith.constant 0 : i32
    return %c0_i32, %c0_i32_0 : i32, i32
  }
  func.func @transform_5(%arg0: i32, %arg1: i32) -> (i32, i32) {
    %c0_i32 = arith.constant 0 : i32
    %c0_i32_0 = arith.constant 0 : i32
    %c0_i32_1 = arith.constant 0 : i32
    return %c0_i32, %c0_i32_0 : i32, i32
  }
  func.func @transform_6(%arg0: i32, %arg1: i32) -> (i32, i32) {
    %c0_i32 = arith.constant 0 : i32
    %c0_i32_0 = arith.constant 0 : i32
    %c0_i32_1 = arith.constant 0 : i32
    return %c0_i32, %c0_i32_0 : i32, i32
  }
  func.func @transform_7(%arg0: i32, %arg1: i32) -> (i32, i32) {
    %c0_i32 = arith.constant 0 : i32
    %c0_i32_0 = arith.constant 0 : i32
    return %arg0, %c0_i32 : i32, i32
  }
}

</mosaic_0001>

<llo_original>
// kernel: tpu_custom_call.1
$region0: #{tpu_custom_call.1}
  #allocation0 [shape = 'u32[]', space=smem, size = 0x4, offset = 0x4, fixed_abs, tag = 'smem constant byte address 0x4 - core index']
  #allocation1 [shape = 'u32[144,128]{1,0:T(1,128)}', space=vmem, size = 0x12000, scoped, tag = 'internal scratch']
  #allocation2 [shape = 'f32[8,128]{1,0:T(8,128)}', space=vmem, size = 0x1000, scoped, tag = 'scratch operand']
  #allocation3 [shape = 'f32[8,1]{1,0:T(8,128)}', space=vmem, size = 0x1000, scoped, tag = 'scratch operand']
  #allocation4 [shape = 'f32[8,1]{1,0:T(8,128)}', space=vmem, size = 0x1000, scoped, tag = 'scratch operand']
  #allocation5 [shape = 'f32[8,128]{1,0:T(8,128)}', space=vmem, size = 0x1000, scoped, tag = 'scratch operand']
  %s0 = inlined_call_operand.hbm [shape: f32[8,8,128], index: 0, kind: input, shape index: {}]
  %s1 = inlined_call_operand.vmem [shape: f32[8,32], index: 1, kind: input, shape index: {}]
  %s2 = inlined_call_operand.vmem [shape: s32[8,1], index: 2, kind: input, shape index: {}]
  %s3 = inlined_call_operand.hbm [shape: f32[128,128], index: 3, kind: input, shape index: {}]
  %s4 = inlined_call_operand.hbm [shape: f32[32,128], index: 4, kind: input, shape index: {}]
  %s5 = inlined_call_operand.vmem [shape: f32[1,128], index: 5, kind: input, shape index: {}]
  %s6 = inlined_call_operand.vmem [shape: f32[1,128], index: 6, kind: input, shape index: {}]
  %s7 = inlined_call_operand.hbm [shape: f32[8,128], index: 7, kind: output, shape index: {}]
  %s8 = sld [smem:[#allocation0]]
  $region58: #{tpu_custom_call.1} parent=0
    _
  %s10 = ssub.s32 1, %s8
  %s11 = scalar_select 0, %s10, %s8
  $region1: #{tpu_custom_call.1} parent=0
    #allocation6 [shape = 'u8[32768]{0}', space=vmem, size = 0x8000, scoped, tag = 'input window, operand 0, single buffered']
    #allocation7 [shape = 's32[1]{0}', space=sflag, size = 0x4, scoped, tag = 'scoped memory for tpu_custom_call.1']
    #allocation8 [shape = 's32[1]{0}', space=sflag, size = 0x4, scoped, tag = 'scoped memory for tpu_custom_call.1']
    #allocation9 [shape = 'u8[65536]{0}', space=vmem, size = 0x10000, scoped, tag = 'input window, operand 3, single buffered']
    #allocation10 [shape = 's32[1]{0}', space=sflag, size = 0x4, scoped, tag = 'scoped memory for tpu_custom_call.1']
    #allocation11 [shape = 'u8[16384]{0}', space=vmem, size = 0x4000, scoped, tag = 'input window, operand 4, single buffered']
    #allocation12 [shape = 'u8[4096]{0}', space=vmem, size = 0x1000, scoped, tag = 'output window, operand 0, single buffered']
    %12 = vsyncpa [#allocation7], 0
    %13 = vsyncpa [#allocation10], 0
    %14 = vsyncpa [#allocation8], 0
    // Predicated region
    $region2: #{tpu_custom_call.1} parent=1 // pred_check
      _
    $region3: #{tpu_custom_call.1} parent=1 // pred_check_branch
      %16 = sbr.rel (0) target = $region5
    $region4: #{tpu_custom_call.1} parent=1 // pred_region
      %s18 = ssub.s32 1024, 1024
      %19 = vsyncadd [#allocation7], %s18
      %s20 = sshll.u32 [#allocation6], 4
      %s21 = int_to_ptr.vmem [resolvable:$true] %s20
      %26 = dma.hbm_to_vmem [thread:$0]  %s0, 1024, %s21, [#allocation7], 128, 128, 8
    $region5: #{tpu_custom_call.1} parent=1 // pred_fallthru
      _
    // Predicated region
    $region6: #{tpu_custom_call.1} parent=1 // pred_check
      _
    $region7: #{tpu_custom_call.1} parent=1 // pred_check_branch
      %28 = sbr.rel (0) target = $region9
    $region8: #{tpu_custom_call.1} parent=1 // pred_region
      _
    $region9: #{tpu_custom_call.1} parent=1 // pred_fallthru
      _
    // Predicated region
    $region10: #{tpu_custom_call.1} parent=1 // pred_check
      _
    $region11: #{tpu_custom_call.1} parent=1 // pred_check_branch
      %30 = sbr.rel (0) target = $region13
    $region12: #{tpu_custom_call.1} parent=1 // pred_region
      _
    $region13: #{tpu_custom_call.1} parent=1 // pred_fallthru
      _
    // Predicated region
    $region14: #{tpu_custom_call.1} parent=1 // pred_check
      _
    $region15: #{tpu_custom_call.1} parent=1 // pred_check_branch
      %32 = sbr.rel (0) target = $region17
    $region16: #{tpu_custom_call.1} parent=1 // pred_region
      %s34 = ssub.s32 2048, 2048
      %35 = vsyncadd [#allocation10], %s34
      %s36 = sshll.u32 [#allocation9], 4
      %s37 = int_to_ptr.vmem [resolvable:$true] %s36
      %42 = dma.hbm_to_vmem [thread:$0]  %s3, 2048, %s37, [#allocation10], 128, 128, 8
    $region17: #{tpu_custom_call.1} parent=1 // pred_fallthru
      _
    // Predicated region
    $region18: #{tpu_custom_call.1} parent=1 // pred_check
      _
    $region19: #{tpu_custom_call.1} parent=1 // pred_check_branch
      %44 = sbr.rel (0) target = $region21
    $region20: #{tpu_custom_call.1} parent=1 // pred_region
      %s46 = ssub.s32 512, 512
      %47 = vsyncadd [#allocation10], %s46
      %s48 = sshll.u32 [#allocation11], 4
      %s49 = int_to_ptr.vmem [resolvable:$true] %s48
      %54 = dma.hbm_to_vmem [thread:$0]  %s4, 512, %s49, [#allocation10], 128, 128, 8
    $region21: #{tpu_custom_call.1} parent=1 // pred_fallthru
      _
    // Predicated region
    $region22: #{tpu_custom_call.1} parent=1 // pred_check
      _
    $region23: #{tpu_custom_call.1} parent=1 // pred_check_branch
      %56 = sbr.rel (0) target = $region25
    $region24: #{tpu_custom_call.1} parent=1 // pred_region
      _
    $region25: #{tpu_custom_call.1} parent=1 // pred_fallthru
      _
    // Predicated region
    $region26: #{tpu_custom_call.1} parent=1 // pred_check
      _
    $region27: #{tpu_custom_call.1} parent=1 // pred_check_branch
      %58 = sbr.rel (0) target = $region29
    $region28: #{tpu_custom_call.1} parent=1 // pred_region
      _
    $region29: #{tpu_custom_call.1} parent=1 // pred_fallthru
      _
    // Predicated region
    $region30: #{tpu_custom_call.1} parent=1 // pred_check
      _
    $region31: #{tpu_custom_call.1} parent=1 // pred_check_branch
      %60 = sbr.rel (0) target = $region33
    $region32: #{tpu_custom_call.1} parent=1 // pred_region
      %61 = dma.done [#allocation7], 1024
    $region33: #{tpu_custom_call.1} parent=1 // pred_fallthru
      _
    // Predicated region
    $region34: #{tpu_custom_call.1} parent=1 // pred_check
      _
    $region35: #{tpu_custom_call.1} parent=1 // pred_check_branch
      %63 = sbr.rel (0) target = $region37
    $region36: #{tpu_custom_call.1} parent=1 // pred_region
      %64 = dma.done [#allocation10], 2048
    $region37: #{tpu_custom_call.1} parent=1 // pred_fallthru
      _
    // Predicated region
    $region38: #{tpu_custom_call.1} parent=1 // pred_check
      _
    $region39: #{tpu_custom_call.1} parent=1 // pred_check_branch
      %66 = sbr.rel (0) target = $region41
    $region40: #{tpu_custom_call.1} parent=1 // pred_region
      %67 = dma.done [#allocation10], 512
    $region41: #{tpu_custom_call.1} parent=1 // pred_fallthru
      _
    %p68 = scmp.eq.s32.totalorder 0, 0
    // Predicated region
    $region42: #{tpu_custom_call.1} parent=1 // pred_check
      %p69 = pneg %p68
    $region43: #{tpu_custom_call.1} parent=1 // pred_check_branch
      %71 = sbr.rel (%p69) target = $region45
    $region44: #{tpu_custom_call.1} parent=1 // pred_region
      %v72 = vld [vmem:[%s1] sm:$0xff]
      %v73 = vld [vmem:[#allocation11] sm:$0xff]
      %v74 = vld [vmem:[#allocation11 + $0x8] sm:$0xff]
      %v75 = vld [vmem:[#allocation11 + $0x10] sm:$0xff]
      %v76 = vld [vmem:[#allocation11 + $0x18] sm:$0xff]
      %v77 = vld [vmem:[%s5] sm:$0x1]
      %v79 = vlaneseq
      %v80 = vshrl.u32 %v79, 7
      %v81 = vsub.s32 0, %v80
      %v82 = vrot.slane %v77, %v81
      %vm84 = vcmask 261120
      %v86 = vsel %vm84, %v72, 0
      %88 = vmatprep.subr.mxu0 0.0
      %89 = vmatpush1.msra.mxu0 %v73
      %90 = vmatprep.subr.mxu0 0.0
      %91 = vmatpush1.msra.mxu0 %v74
      %92 = vmatprep.subr.mxu0 0.0
      %93 = vmatpush1.msra.mxu0 %v75
      %94 = vmatprep.subr.mxu0 0.0
      %95 = vmatpush1.msra.mxu0 %v76
      %96 = vmatprep.subr.mxu0 0.0
      %97 = vmatpush1.msra.mxu0 0.0
      %98 = vmatprep.subr.mxu0 0.0
      %99 = vmatpush1.msra.mxu0 0.0
      %100 = vmatprep.subr.mxu0 0.0
      %101 = vmatpush1.msra.mxu0 0.0
      %102 = vmatprep.subr.mxu0 0.0
      %103 = vmatpush1.msra.mxu0 0.0
      %104 = vmatprep.subr.mxu0 0.0
      %105 = vmatpush1.msra.mxu0 0.0
      %106 = vmatprep.subr.mxu0 0.0
      %107 = vmatpush1.msra.mxu0 0.0
      %108 = vmatprep.subr.mxu0 0.0
      %109 = vmatpush1.msra.mxu0 0.0
      %110 = vmatprep.subr.mxu0 0.0
      %111 = vmatpush1.msra.mxu0 0.0
      %112 = vmatprep.subr.mxu0 0.0
      %113 = vmatpush1.msra.mxu0 0.0
      %114 = vmatprep.subr.mxu0 0.0
      %115 = vmatpush1.msra.mxu0 0.0
      %116 = vmatprep.subr.mxu0 0.0
      %117 = vmatpush1.msra.mxu0 0.0
      %118 = vmatprep.subr.mxu0 0.0
      %119 = vmatpush1.msra.mxu0 0.0
      %120 = vmatprep.subr.mxu0 0.0
      %121 = vmatpush1.msra.mxu0 0.0
      %122 = vmatprep.subr.mxu0 0.0
      %123 = vmatpush1.msra.mxu0 0.0
      %124 = vmatprep.subr.mxu0 0.0
      %125 = vmatpush1.msra.mxu0 0.0
      %126 = vmatprep.subr.mxu0 0.0
      %127 = vmatpush1.msra.mxu0 0.0
      %128 = vmatprep.subr.mxu0 0.0
      %129 = vmatpush1.msra.mxu0 0.0
      %130 = vmatprep.subr.mxu0 0.0
      %131 = vmatpush1.msra.mxu0 0.0
      %132 = vmatprep.subr.mxu0 0.0
      %133 = vmatpush1.msra.mxu0 0.0
      %134 = vmatprep.subr.mxu0 0.0
      %135 = vmatpush1.msra.mxu0 0.0
      %136 = vmatprep.subr.mxu0 0.0
      %137 = vmatpush1.msra.mxu0 0.0
      %138 = vmatprep.subr.mxu0 0.0
      %139 = vmatpush1.msra.mxu0 0.0
      %140 = vmatprep.subr.mxu0 0.0
      %141 = vmatpush1.msra.mxu0 0.0
      %142 = vmatprep.subr.mxu0 0.0
      %143 = vmatpush1.msra.mxu0 0.0
      %144 = vmatprep.subr.mxu0 0.0
      %145 = vmatpush1.msra.mxu0 0.0
      %146 = vmatprep.subr.mxu0 0.0
      %147 = vmatpush1.msra.mxu0 0.0
      %148 = vmatprep.subr.mxu0 0.0
      %149 = vmatpush1.msra.mxu0 0.0
      %150 = vmatprep.subr.mxu0 0.0
      %151 = vmatpush1.msra.mxu0 0.0
      %152 = vmatprep.mubr.f32.mxu0 0.0
      %153 = vmatmul.mubr.f32.gmra.mrb[0].mxu0 %v86
      %v154 = vpop.f32.mrb[0].mxu0
      %v155 = vadd.f32 %v82, %v154
      %v156 = vpop.f32.mrb[0].mxu0
      %157 = vdwg.mxu0
      %158 = vst [vmem:[#allocation2] sm:$0xff] %v155
      %vm159 = vcmask 7168
      %160 = vst.msk [vmem:[#allocation3] sm:$0xff] %vm159, -1e+30
      %161 = vst.msk [vmem:[#allocation4] sm:$0xff] %vm159, 0.0
      %162 = vst [vmem:[#allocation5] sm:$0xff] 0.0
    $region45: #{tpu_custom_call.1} parent=1 // pred_fallthru
      _
    %v163 = vld [vmem:[#allocation6] sm:$0xff]
    %v164 = vld [vmem:[#allocation6 + $0x8] sm:$0xff]
    %v165 = vld [vmem:[#allocation6 + $0x10] sm:$0xff]
    %v166 = vld [vmem:[#allocation6 + $0x18] sm:$0xff]
    %v167 = vld [vmem:[#allocation6 + $0x20] sm:$0xff]
    %v168 = vld [vmem:[#allocation6 + $0x28] sm:$0xff]
    %v169 = vld [vmem:[#allocation6 + $0x30] sm:$0xff]
    %v170 = vld [vmem:[#allocation6 + $0x38] sm:$0xff]
    %v171 = vld [vmem:[#allocation9] sm:$0xff]
    %v172 = vld [vmem:[#allocation9 + $0x8] sm:$0xff]
    %v173 = vld [vmem:[#allocation9 + $0x10] sm:$0xff]
    %v174 = vld [vmem:[#allocation9 + $0x18] sm:$0xff]
    %v175 = vld [vmem:[#allocation9 + $0x20] sm:$0xff]
    %v176 = vld [vmem:[#allocation9 + $0x28] sm:$0xff]
    %v177 = vld [vmem:[#allocation9 + $0x30] sm:$0xff]
    %v178 = vld [vmem:[#allocation9 + $0x38] sm:$0xff]
    %v179 = vld [vmem:[#allocation9 + $0x40] sm:$0xff]
    %v180 = vld [vmem:[#allocation9 + $0x48] sm:$0xff]
    %v181 = vld [vmem:[#allocation9 + $0x50] sm:$0xff]
    %v182 = vld [vmem:[#allocation9 + $0x58] sm:$0xff]
    %v183 = vld [vmem:[#allocation9 + $0x60] sm:$0xff]
    %v184 = vld [vmem:[#allocation9 + $0x68] sm:$0xff]
    %v185 = vld [vmem:[#allocation9 + $0x70] sm:$0xff]
    %v186 = vld [vmem:[#allocation9 + $0x78] sm:$0xff]
    %187 = vmatprep.subr.mxu0 0.0
    %188 = vmatpush1.msra.mxu0 %v171
    %189 = vmatprep.subr.mxu0 0.0
    %190 = vmatpush1.msra.mxu0 %v172
    %191 = vmatprep.subr.mxu0 0.0
    %192 = vmatpush1.msra.mxu0 %v173
    %193 = vmatprep.subr.mxu0 0.0
    %194 = vmatpush1.msra.mxu0 %v174
    %195 = vmatprep.subr.mxu0 0.0
    %196 = vmatpush1.msra.mxu0 %v175
    %197 = vmatprep.subr.mxu0 0.0
    %198 = vmatpush1.msra.mxu0 %v176
    %199 = vmatprep.subr.mxu0 0.0
    %200 = vmatpush1.msra.mxu0 %v177
    %201 = vmatprep.subr.mxu0 0.0
    %202 = vmatpush1.msra.mxu0 %v178
    %203 = vmatprep.subr.mxu0 0.0
    %204 = vmatpush1.msra.mxu0 %v179
    %205 = vmatprep.subr.mxu0 0.0
    %206 = vmatpush1.msra.mxu0 %v180
    %207 = vmatprep.subr.mxu0 0.0
    %208 = vmatpush1.msra.mxu0 %v181
    %209 = vmatprep.subr.mxu0 0.0
    %210 = vmatpush1.msra.mxu0 %v182
    %211 = vmatprep.subr.mxu0 0.0
    %212 = vmatpush1.msra.mxu0 %v183
    %213 = vmatprep.subr.mxu0 0.0
    %214 = vmatpush1.msra.mxu0 %v184
    %215 = vmatprep.subr.mxu0 0.0
    %216 = vmatpush1.msra.mxu0 %v185
    %217 = vmatprep.subr.mxu0 0.0
    %218 = vmatpush1.msra.mxu0 %v186
    %219 = vmatprep.subr.mxu0 0.0
    %220 = vmatpush1.msra.mxu0 0.0
    %221 = vmatprep.subr.mxu0 0.0
    %222 = vmatpush1.msra.mxu0 0.0
    %223 = vmatprep.subr.mxu0 0.0
    %224 = vmatpush1.msra.mxu0 0.0
    %225 = vmatprep.subr.mxu0 0.0
    %226 = vmatpush1.msra.mxu0 0.0
    %227 = vmatprep.subr.mxu0 0.0
    %228 = vmatpush1.msra.mxu0 0.0
    %229 = vmatprep.subr.mxu0 0.0
    %230 = vmatpush1.msra.mxu0 0.0
    %231 = vmatprep.subr.mxu0 0.0
    %232 = vmatpush1.msra.mxu0 0.0
    %233 = vmatprep.subr.mxu0 0.0
    %234 = vmatpush1.msra.mxu0 0.0
    %235 = vmatprep.subr.mxu0 0.0
    %236 = vmatpush1.msra.mxu0 0.0
    %237 = vmatprep.subr.mxu0 0.0
    %238 = vmatpush1.msra.mxu0 0.0
    %239 = vmatprep.subr.mxu0 0.0
    %240 = vmatpush1.msra.mxu0 0.0
    %241 = vmatprep.subr.mxu0 0.0
    %242 = vmatpush1.msra.mxu0 0.0
    %243 = vmatprep.subr.mxu0 0.0
    %244 = vmatpush1.msra.mxu0 0.0
    %245 = vmatprep.subr.mxu0 0.0
    %246 = vmatpush1.msra.mxu0 0.0
    %247 = vmatprep.subr.mxu0 0.0
    %248 = vmatpush1.msra.mxu0 0.0
    %249 = vmatprep.subr.mxu0 0.0
    %250 = vmatpush1.msra.mxu0 0.0
    %251 = vmatprep.mubr.f32.mxu0 0.0
    %252 = vmatmul.mubr.f32.gmra.mrb[0].mxu0 %v163
    %v253 = vpop.f32.mrb[0].mxu0
    %v254 = vadd.f32 0.0, %v253
    %v255 = vpop.f32.mrb[0].mxu0
    %256 = vmatprep.mubr.f32.mxu0 0.0
    %257 = vmatmul.mubr.f32.gmra.mrb[0].mxu0 %v164
    %v258 = vpop.f32.mrb[0].mxu0
    %v259 = vadd.f32 0.0, %v258
    %v260 = vpop.f32.mrb[0].mxu0
    %261 = vmatprep.mubr.f32.mxu0 0.0
    %262 = vmatmul.mubr.f32.gmra.mrb[0].mxu0 %v165
    %v263 = vpop.f32.mrb[0].mxu0
    %v264 = vadd.f32 0.0, %v263
    %v265 = vpop.f32.mrb[0].mxu0
    %266 = vmatprep.mubr.f32.mxu0 0.0
    %267 = vmatmul.mubr.f32.gmra.mrb[0].mxu0 %v166
    %v268 = vpop.f32.mrb[0].mxu0
    %v269 = vadd.f32 0.0, %v268
    %v270 = vpop.f32.mrb[0].mxu0
    %271 = vmatprep.mubr.f32.mxu0 0.0
    %272 = vmatmul.mubr.f32.gmra.mrb[0].mxu0 %v167
    %v273 = vpop.f32.mrb[0].mxu0
    %v274 = vadd.f32 0.0, %v273
    %v275 = vpop.f32.mrb[0].mxu0
    %276 = vmatprep.mubr.f32.mxu0 0.0
    %277 = vmatmul.mubr.f32.gmra.mrb[0].mxu0 %v168
    %v278 = vpop.f32.mrb[0].mxu0
    %v279 = vadd.f32 0.0, %v278
    %v280 = vpop.f32.mrb[0].mxu0
    %281 = vmatprep.mubr.f32.mxu0 0.0
    %282 = vmatmul.mubr.f32.gmra.mrb[0].mxu0 %v169
    %v283 = vpop.f32.mrb[0].mxu0
    %v284 = vadd.f32 0.0, %v283
    %v285 = vpop.f32.mrb[0].mxu0
    %286 = vmatprep.mubr.f32.mxu0 0.0
    %287 = vmatmul.mubr.f32.gmra.mrb[0].mxu0 %v170
    %v288 = vpop.f32.mrb[0].mxu0
    %v289 = vadd.f32 0.0, %v288
    %v290 = vpop.f32.mrb[0].mxu0
    %291 = vdwg.mxu0
    %v292 = vld [vmem:[#allocation2] sm:$0xff]
    %v294 = vcombine.high %v292, %v292
    %v296 = vunpack.c.l.s4 1966171168
    %v297 = vunpack.c.0.s8 %v296
    %v298 = vlaneseq
    %v299 = vshrl.u32 %v298, 7
    %v300 = vsub.s32 %v297, %v299
    %v301 = vrot.slane %v292, %v300
    %v303 = vunpack.c.l.s4 1966171168
    %v304 = vunpack.c.0.s8 %v303
    %v305 = vlaneseq
    %v306 = vshrl.u32 %v305, 7
    %v307 = vsub.s32 %v304, %v306
    %v308 = vrot.slane %v294, %v307
    %v309 = vcombine.high %v301, %v301
    %v310 = vcombine.high %v308, %v308
    %v312 = vunpack.c.l.s4 1966171168
    %v313 = vunpack.c.0.s8 %v312
    %v314 = vlaneseq
    %v315 = vshrl.u32 %v314, 7
    %v316 = vsub.s32 %v313, %v315
    %v317 = vrot.slane %v301, %v316
    %v319 = vunpack.c.l.s4 1966171168
    %v320 = vunpack.c.0.s8 %v319
    %v321 = vlaneseq
    %v322 = vshrl.u32 %v321, 7
    %v323 = vsub.s32 %v320, %v322
    %v324 = vrot.slane %v308, %v323
    %v326 = vunpack.c.l.s4 1966171168
    %v327 = vunpack.c.0.s8 %v326
    %v328 = vlaneseq
    %v329 = vshrl.u32 %v328, 7
    %v330 = vsub.s32 %v327, %v329
    %v331 = vrot.slane %v309, %v330
    %v333 = vunpack.c.l.s4 1966171168
    %v334 = vunpack.c.0.s8 %v333
    %v335 = vlaneseq
    %v336 = vshrl.u32 %v335, 7
    %v337 = vsub.s32 %v334, %v336
    %v338 = vrot.slane %v310, %v337
    %v339 = vcombine.high %v317, %v317
    %v340 = vcombine.high %v324, %v324
    %v341 = vcombine.high %v331, %v331
    %v342 = vcombine.high %v338, %v338
    %v343 = vlaneseq
    %v344 = vshrl.u32 %v343, 7
    %v345 = vsub.s32 0, %v344
    %v346 = vrot.slane %v317, %v345
    %v347 = vlaneseq
    %v348 = vshrl.u32 %v347, 7
    %v349 = vsub.s32 0, %v348
    %v350 = vrot.slane %v331, %v349
    %v351 = vlaneseq
    %v352 = vshrl.u32 %v351, 7
    %v353 = vsub.s32 0, %v352
    %v354 = vrot.slane %v339, %v353
    %v355 = vlaneseq
    %v356 = vshrl.u32 %v355, 7
    %v357 = vsub.s32 0, %v356
    %v358 = vrot.slane %v341, %v357
    %v359 = vlaneseq
    %v360 = vshrl.u32 %v359, 7
    %v361 = vsub.s32 0, %v360
    %v362 = vrot.slane %v324, %v361
    %v363 = vlaneseq
    %v364 = vshrl.u32 %v363, 7
    %v365 = vsub.s32 0, %v364
    %v366 = vrot.slane %v338, %v365
    %v367 = vlaneseq
    %v368 = vshrl.u32 %v367, 7
    %v369 = vsub.s32 0, %v368
    %v370 = vrot.slane %v340, %v369
    %v371 = vlaneseq
    %v372 = vshrl.u32 %v371, 7
    %v373 = vsub.s32 0, %v372
    %v374 = vrot.slane %v342, %v373
    %v383 = vadd.f32 %v254, %v346
    %v384 = vadd.f32 %v259, %v350
    %v385 = vadd.f32 %v264, %v354
    %v386 = vadd.f32 %v269, %v358
    %v387 = vadd.f32 %v274, %v362
    %v388 = vadd.f32 %v279, %v366
    %v389 = vadd.f32 %v284, %v370
    %v390 = vadd.f32 %v289, %v374
    %v391 = vtanh.pop %v383
    %v392 = vtanh.pop %v384
    %v393 = vtanh.pop %v385
    %v394 = vtanh.pop %v386
    %v395 = vtanh.pop %v387
    %v396 = vtanh.pop %v388
    %v397 = vtanh.pop %v389
    %v398 = vtanh.pop %v390
    %v399 = vld [vmem:[%s6] sm:$0x1]
    %v401 = vlaneseq
    %v402 = vshrl.u32 %v401, 7
    %v403 = vsub.s32 0, %v402
    %v404 = vrot.slane %v399, %v403
    %v406 = vmul.f32 %v391, %v404
    %v407 = vmul.f32 %v392, %v404
    %v408 = vmul.f32 %v393, %v404
    %v409 = vmul.f32 %v394, %v404
    %v410 = vmul.f32 %v395, %v404
    %v411 = vmul.f32 %v396, %v404
    %v412 = vmul.f32 %v397, %v404
    %v413 = vmul.f32 %v398, %v404
    %414 = vadd.xlane.f32.xlu0 %v406
    %v415 = vpop.xlane.xlu0 %414
    %416 = vadd.xlane.f32.xlu0 %v407
    %v417 = vpop.xlane.xlu0 %416
    %418 = vadd.xlane.f32.xlu0 %v408
    %v419 = vpop.xlane.xlu0 %418
    %420 = vadd.xlane.f32.xlu0 %v409
    %v421 = vpop.xlane.xlu0 %420
    %422 = vadd.xlane.f32.xlu0 %v410
    %v423 = vpop.xlane.xlu0 %422
    %424 = vadd.xlane.f32.xlu0 %v411
    %v425 = vpop.xlane.xlu0 %424
    %426 = vadd.xlane.f32.xlu0 %v412
    %v427 = vpop.xlane.xlu0 %426
    %428 = vadd.xlane.f32.xlu0 %v413
    %v429 = vpop.xlane.xlu0 %428
    %s430 = smul.u32 0, 8
    %v431 = vlaneseq
    %v432 = vand.u32 %v431, 127
    %v433 = vstv %s430
    %v434 = vadd.s32 %v433, %v432
    %v435 = vld [vmem:[%s2] sm:$0xff]
    %436 = vset.pattern.permute.xlu0 0
    %437 = vperm.xlu0 %436, %v435
    %v438 = vpop.permute.xlu0 %437
    %vm439 = vcmp.lt.s32.totalorder %v434, %v438
    %v448 = vlaneseq
    %v449 = vshrl.u32 %v448, 7
    %v450 = vsub.s32 %v432, %v449
    %v451 = vrot.slane %v415, %v450
    %v452 = vlaneseq
    %v453 = vshrl.u32 %v452, 7
    %v454 = vsub.s32 %v432, %v453
    %v455 = vrot.slane %v417, %v454
    %v456 = vlaneseq
    %v457 = vshrl.u32 %v456, 7
    %v458 = vsub.s32 %v432, %v457
    %v459 = vrot.slane %v419, %v458
    %v460 = vlaneseq
    %v461 = vshrl.u32 %v460, 7
    %v462 = vsub.s32 %v432, %v461
    %v463 = vrot.slane %v421, %v462
    %v464 = vlaneseq
    %v465 = vshrl.u32 %v464, 7
    %v466 = vsub.s32 %v432, %v465
    %v467 = vrot.slane %v423, %v466
    %v468 = vlaneseq
    %v469 = vshrl.u32 %v468, 7
    %v470 = vsub.s32 %v432, %v469
    %v471 = vrot.slane %v425, %v470
    %v472 = vlaneseq
    %v473 = vshrl.u32 %v472, 7
    %v474 = vsub.s32 %v432, %v473
    %v475 = vrot.slane %v427, %v474
    %v476 = vlaneseq
    %v477 = vshrl.u32 %v476, 7
    %v478 = vsub.s32 %v432, %v477
    %v479 = vrot.slane %v429, %v478
    %vm480 = vcmask 1041409
    %v481 = vsel %vm480, %v455, %v451
    %vm482 = vcmask 1042434
    %v483 = vsel %vm482, %v459, %v481
    %vm484 = vcmask 1043459
    %v485 = vsel %vm484, %v463, %v483
    %vm486 = vcmask 1044484
    %v487 = vsel %vm486, %v467, %v485
    %vm488 = vcmask 1045509
    %v489 = vsel %vm488, %v471, %v487
    %vm490 = vcmask 1046534
    %v491 = vsel %vm490, %v475, %v489
    %vm492 = vcmask 1047559
    %v493 = vsel %vm492, %v479, %v491
    %v495 = vsel %vm439, %v493, -1e+30
    %v496 = vld [vmem:[#allocation3] sm:$0xff]
    %vm497 = vcmask 64512
    %v498 = vsel %vm497, %v495, -inf
    %499 = vmax.xlane.f32.xlu0 %v498
    %v500 = vpop.xlane.xlu0 %499
    %v501 = vmax.f32 %v496, %v500
    %v502 = vsub.f32 %v496, %v501
    %v503 = vmul.f32 %v502, 1.442695
    %v504 = vpow.pop %v503
    %506 = vset.pattern.permute.xlu0 0
    %507 = vperm.xlu0 %506, %v501
    %v508 = vpop.permute.xlu0 %507
    %v510 = vsub.f32 %v495, %v508
    %v511 = vmul.f32 %v510, 1.442695
    %v512 = vpow.pop %v511
    %v513 = vld [vmem:[#allocation4] sm:$0xff]
    %v514 = vmul.f32 %v504, %v513
    %v515 = vsel %vm497, %v512, 0.0
    %516 = vadd.xlane.f32.xlu0 %v515
    %v517 = vpop.xlane.xlu0 %516
    %v518 = vadd.f32 %v514, %v517
    %vm519 = vcmask 7168
    %520 = vst.msk [vmem:[#allocation4] sm:$0xff] %vm519, %v518
    %v521 = vld [vmem:[#allocation5] sm:$0xff]
    %523 = vset.pattern.permute.xlu0 0
    %524 = vperm.xlu0 %523, %v504
    %v525 = vpop.permute.xlu0 %524
    %v527 = vmul.f32 %v525, %v521
    %v528 = vlaneseq
    %v529 = vshrl.u32 %v528, 7
    %v530 = vsub.s32 0, %v529
    %v531 = vrot.slane %v512, %v530
    %533 = vbcast.lane.b32.xlu0 %v531, 256
    %v534 = vpop.permute.xlu0 %533
    %v535 = vlaneseq
    %v536 = vshrl.u32 %v535, 7
    %v537 = vsub.s32 1, %v536
    %v538 = vrot.slane %v512, %v537
    %540 = vbcast.lane.b32.xlu0 %v538, 256
    %v541 = vpop.permute.xlu0 %540
    %v542 = vlaneseq
    %v543 = vshrl.u32 %v542, 7
    %v544 = vsub.s32 2, %v543
    %v545 = vrot.slane %v512, %v544
    %547 = vbcast.lane.b32.xlu0 %v545, 256
    %v548 = vpop.permute.xlu0 %547
    %v549 = vlaneseq
    %v550 = vshrl.u32 %v549, 7
    %v551 = vsub.s32 3, %v550
    %v552 = vrot.slane %v512, %v551
    %554 = vbcast.lane.b32.xlu0 %v552, 256
    %v555 = vpop.permute.xlu0 %554
    %v556 = vlaneseq
    %v557 = vshrl.u32 %v556, 7
    %v558 = vsub.s32 4, %v557
    %v559 = vrot.slane %v512, %v558
    %561 = vbcast.lane.b32.xlu0 %v559, 256
    %v562 = vpop.permute.xlu0 %561
    %v563 = vlaneseq
    %v564 = vshrl.u32 %v563, 7
    %v565 = vsub.s32 5, %v564
    %v566 = vrot.slane %v512, %v565
    %568 = vbcast.lane.b32.xlu0 %v566, 256
    %v569 = vpop.permute.xlu0 %568
    %v570 = vlaneseq
    %v571 = vshrl.u32 %v570, 7
    %v572 = vsub.s32 6, %v571
    %v573 = vrot.slane %v512, %v572
    %575 = vbcast.lane.b32.xlu0 %v573, 256
    %v576 = vpop.permute.xlu0 %575
    %v577 = vlaneseq
    %v578 = vshrl.u32 %v577, 7
    %v579 = vsub.s32 7, %v578
    %v580 = vrot.slane %v512, %v579
    %582 = vbcast.lane.b32.xlu0 %v580, 256
    %v583 = vpop.permute.xlu0 %582
    %v584 = vmul.f32 %v534, %v163
    %v585 = vmul.f32 %v541, %v164
    %v586 = vmul.f32 %v548, %v165
    %v587 = vmul.f32 %v555, %v166
    %v588 = vmul.f32 %v562, %v167
    %v589 = vmul.f32 %v569, %v168
    %v590 = vmul.f32 %v576, %v169
    %v591 = vmul.f32 %v583, %v170
    %v592 = vrot.slane %v584, 4
    %v593 = vadd.f32 %v584, %v592
    %v594 = vrot.slane %v593, 2
    %v595 = vadd.f32 %v593, %v594
    %v596 = vrot.slane %v595, 1
    %v597 = vadd.f32 %v595, %v596
    %v598 = vrot.slane %v585, 4
    %v599 = vadd.f32 %v585, %v598
    %v600 = vrot.slane %v599, 2
    %v601 = vadd.f32 %v599, %v600
    %v602 = vrot.slane %v601, 1
    %v603 = vadd.f32 %v601, %v602
    %v604 = vrot.slane %v586, 4
    %v605 = vadd.f32 %v586, %v604
    %v606 = vrot.slane %v605, 2
    %v607 = vadd.f32 %v605, %v606
    %v608 = vrot.slane %v607, 1
    %v609 = vadd.f32 %v607, %v608
    %v610 = vrot.slane %v587, 4
    %v611 = vadd.f32 %v587, %v610
    %v612 = vrot.slane %v611, 2
    %v613 = vadd.f32 %v611, %v612
    %v614 = vrot.slane %v613, 1
    %v615 = vadd.f32 %v613, %v614
    %v616 = vrot.slane %v588, 4
    %v617 = vadd.f32 %v588, %v616
    %v618 = vrot.slane %v617, 2
    %v619 = vadd.f32 %v617, %v618
    %v620 = vrot.slane %v619, 1
    %v621 = vadd.f32 %v619, %v620
    %v622 = vrot.slane %v589, 4
    %v623 = vadd.f32 %v589, %v622
    %v624 = vrot.slane %v623, 2
    %v625 = vadd.f32 %v623, %v624
    %v626 = vrot.slane %v625, 1
    %v627 = vadd.f32 %v625, %v626
    %v628 = vrot.slane %v590, 4
    %v629 = vadd.f32 %v590, %v628
    %v630 = vrot.slane %v629, 2
    %v631 = vadd.f32 %v629, %v630
    %v632 = vrot.slane %v631, 1
    %v633 = vadd.f32 %v631, %v632
    %v634 = vrot.slane %v591, 4
    %v635 = vadd.f32 %v591, %v634
    %v636 = vrot.slane %v635, 2
    %v637 = vadd.f32 %v635, %v636
    %v638 = vrot.slane %v637, 1
    %v639 = vadd.f32 %v637, %v638
    %v648 = vsel %vm480, %v603, %v597
    %v649 = vsel %vm482, %v609, %v648
    %v650 = vsel %vm484, %v615, %v649
    %v651 = vsel %vm486, %v621, %v650
    %v652 = vsel %vm488, %v627, %v651
    %v653 = vsel %vm490, %v633, %v652
    %v654 = vsel %vm492, %v639, %v653
    %v656 = vadd.f32 %v527, %v654
    %657 = vst [vmem:[#allocation5] sm:$0xff] %v656
    %658 = vst.msk [vmem:[#allocation3] sm:$0xff] %vm519, %v501
    // Predicated region
    $region46: #{tpu_custom_call.1} parent=1 // pred_check
      %p659 = pneg %p68
    $region47: #{tpu_custom_call.1} parent=1 // pred_check_branch
      %661 = sbr.rel (%p659) target = $region49
    $region48: #{tpu_custom_call.1} parent=1 // pred_region
      %v662 = vld [vmem:[#allocation5] sm:$0xff]
      %v663 = vld [vmem:[#allocation4] sm:$0xff]
      %665 = vset.pattern.permute.xlu0 0
      %666 = vperm.xlu0 %665, %v663
      %v667 = vpop.permute.xlu0 %666
      %v669 = vrcp.pop %v667
      %v670 = vmul.f32 %v662, %v669
      %671 = vst [vmem:[#allocation12] sm:$0xff] %v670
    $region49: #{tpu_custom_call.1} parent=1 // pred_fallthru
      _
    // Predicated region
    $region50: #{tpu_custom_call.1} parent=1 // pred_check
      _
    $region51: #{tpu_custom_call.1} parent=1 // pred_check_branch
      %673 = sbr.rel (0) target = $region53
    $region52: #{tpu_custom_call.1} parent=1 // pred_region
      %s675 = ssub.s32 128, 128
      %676 = vsyncadd [#allocation8], %s675
      %s678 = sshll.u32 [#allocation12], 4
      %s679 = int_to_ptr.vmem [resolvable:$true] %s678
      %681 = dma.vmem_to_hbm [thread:$0]  %s679, 128, %s7, [#allocation8]
    $region53: #{tpu_custom_call.1} parent=1 // pred_fallthru
      _
    // Predicated region
    $region54: #{tpu_custom_call.1} parent=1 // pred_check
      _
    $region55: #{tpu_custom_call.1} parent=1 // pred_check_branch
      %683 = sbr.rel (0) target = $region57
    $region56: #{tpu_custom_call.1} parent=1 // pred_region
      %684 = dma.done [#allocation8], 128
    $region57: #{tpu_custom_call.1} parent=1 // pred_fallthru
      _
    %685 = vsyncpa [#allocation7], 1
    %686 = vsyncpa [#allocation10], 1
    %687 = vsyncpa [#allocation8], 1

</llo_original>
